<compile_context>
chip_gen: v5e
topology: v5e:2x2
jax: 0.10.0
libtpu: 0.0.40
codegen_flags: <defaults>
</compile_context>

<pallas_src>
import jax
import jax.numpy as jnp
from jax.experimental import pallas as pl
from jax.experimental.pallas import tpu as pltpu

SEQ_LEN = 5          # seq_length in the PyTorch script
L1 = SEQ_LEN - 1     # 4  (after conv1, kernel_size=2)
L2 = L1 - 1          # 3  (after conv2, kernel_size=2)
C1 = 16              # conv1 out_channels
C2 = 32              # conv2 out_channels
FLAT = C2 * L2       # 96 (flatten_size)
H = 50               # fc1 hidden
OUT = 1              # fc2 out

# Augmented layer sizes (extra bias column / "ones" passthrough row).
X_ROWS = SEQ_LEN + 1          # 6
Y1_ROWS = L1 * C1 + 1         # 65
Y2_ROWS = L2 * C2 + 1         # 97
H_ROWS = H + 1                # 51


def cnn1d_kernel(x_ref, w1_ref, w2_ref, w3_ref, w4_ref, o_ref):
    # x: (X_ROWS, TB) f32, batch on lanes, last row == 1.0 (bias lane).
    x = x_ref[...]
    # conv1 + bias + ReLU  (block-structured (65,6) weight, ones row passthrough)
    y1 = jnp.maximum(
        jnp.dot(w1_ref[...], x, preferred_element_type=jnp.float32), 0.0)   # (65, TB)
    # conv2 + bias + ReLU  (single fused K=65 matmul for all 3 time steps)
    y2 = jnp.maximum(
        jnp.dot(w2_ref[...], y1, preferred_element_type=jnp.float32), 0.0)  # (97, TB)
    # fc1 + bias + ReLU    (flatten permutation baked into the weight columns)
    h = jnp.maximum(
        jnp.dot(w3_ref[...], y2, preferred_element_type=jnp.float32), 0.0)  # (51, TB)
    # fc2 + bias -> lane-dense (1, TB) output block
    o_ref[...] = jnp.dot(w4_ref[...], h, preferred_element_type=jnp.float32)


# ----------------------------------------------------------------------------
# Wrapper-side weight packing (pure JAX glue, traced once under jit).
# ----------------------------------------------------------------------------
def _build_w1(conv1_w, conv1_b):
    """(65, 6): row t*16+o computes conv1 output (o, t); row 64 passes the ones lane."""
    w = jnp.zeros((Y1_ROWS, X_ROWS), jnp.float32)
    k0 = conv1_w[:, 0, 0]
    k1 = conv1_w[:, 0, 1]
    for t in range(L1):
        w = w.at[t * C1:(t + 1) * C1, t].set(k0)
        w = w.at[t * C1:(t + 1) * C1, t + 1].set(k1)
        w = w.at[t * C1:(t + 1) * C1, SEQ_LEN].set(conv1_b)
    w = w.at[L1 * C1, SEQ_LEN].set(1.0)
    return w


def _build_w2(conv2_w, conv2_b):
    """(97, 65): row t*32+o2 computes conv2 output (o2, t); row 96 passes the ones lane."""
    w = jnp.zeros((Y2_ROWS, Y1_ROWS), jnp.float32)
    wk0 = conv2_w[:, :, 0]                       # (32, 16)
    wk1 = conv2_w[:, :, 1]
    for t in range(L2):
        w = w.at[t * C2:(t + 1) * C2, t * C1:(t + 1) * C1].set(wk0)
        w = w.at[t * C2:(t + 1) * C2, (t + 1) * C1:(t + 2) * C1].set(wk1)
        w = w.at[t * C2:(t + 1) * C2, L1 * C1].set(conv2_b)
    w = w.at[L2 * C2, L1 * C1].set(1.0)
    return w


def _build_w3(fc1_w, fc1_b):
    """(51, 97): fc1 with columns permuted from PyTorch's channel-major flatten
    (j_torch = c*L2 + t) to the kernel's time-major ordering (j_kern = t*C2 + c)."""
    w = jnp.zeros((H_ROWS, Y2_ROWS), jnp.float32)
    jk = jnp.arange(FLAT)
    t_idx, c_idx = jk // C2, jk % C2
    torch_cols = c_idx * L2 + t_idx
    w = w.at[:H, :FLAT].set(fc1_w[:, torch_cols])
    w = w.at[:H, FLAT].set(fc1_b)
    w = w.at[H, FLAT].set(1.0)
    return w


def _build_w4(fc2_w, fc2_b):
    """(1, 51): fc2 with bias in the last (ones-row) column."""
    w = jnp.zeros((OUT, H_ROWS), jnp.float32)
    w = w.at[:, :H].set(fc2_w)
    w = w.at[:, H].set(fc2_b)
    return w


def init_params(key):
    """Deterministic parameter init matching the PyTorch module's shapes."""
    ks = jax.random.split(key, 8)
    p = {}
    p["conv1_w"] = jax.random.uniform(ks[0], (C1, 1, 2), jnp.float32, -0.5, 0.5)
    p["conv1_b"] = jax.random.uniform(ks[1], (C1,), jnp.float32, -0.5, 0.5)
    p["conv2_w"] = jax.random.uniform(ks[2], (C2, C1, 2), jnp.float32, -0.2, 0.2)
    p["conv2_b"] = jax.random.uniform(ks[3], (C2,), jnp.float32, -0.2, 0.2)
    p["fc1_w"] = jax.random.uniform(ks[4], (H, FLAT), jnp.float32, -0.1, 0.1)
    p["fc1_b"] = jax.random.uniform(ks[5], (H,), jnp.float32, -0.1, 0.1)
    p["fc2_w"] = jax.random.uniform(ks[6], (OUT, H), jnp.float32, -0.1, 0.1)
    p["fc2_b"] = jax.random.uniform(ks[7], (OUT,), jnp.float32, -0.1, 0.1)
    return p


@jax.jit
def cnn1d_forward(x_ncl, params):
    """x_ncl: (B, 1, 5) float32 -> (B, 1) float32, same semantics as the PyTorch forward."""
    B = x_ncl.shape[0]

    # --- pack weights (block conv structure + bias column + ones passthrough) ---
    w1 = _build_w1(params["conv1_w"], params["conv1_b"])   # (65, 6)
    w2 = _build_w2(params["conv2_w"], params["conv2_b"])   # (97, 65)
    w3 = _build_w3(params["fc1_w"], params["fc1_b"])       # (51, 97)
    w4 = _build_w4(params["fc2_w"], params["fc2_b"])       # (1, 51)

    # --- batch tiling: batch on lanes, tile is a multiple of 128 lanes ---
    tb = min(2048, ((B + 127) // 128) * 128)   # conservative: fits every gen's VMEM
    num_steps = pl.cdiv(B, tb)
    b_pad = num_steps * tb

    x2d = x_ncl.reshape(B, SEQ_LEN).astype(jnp.float32)
    x_aug = jnp.concatenate([x2d.T, jnp.ones((1, B), jnp.float32)], axis=0)  # (6, B)
    if b_pad != B:
        x_aug = jnp.pad(x_aug, ((0, 0), (0, b_pad - B)))

    flops = 2 * b_pad * (Y1_ROWS * X_ROWS + Y2_ROWS * Y1_ROWS
                         + H_ROWS * Y2_ROWS + OUT * H_ROWS)
    w_bytes = 4 * (Y1_ROWS * X_ROWS + Y2_ROWS * Y1_ROWS
                   + H_ROWS * Y2_ROWS + OUT * H_ROWS)
    bytes_accessed = 4 * (X_ROWS + OUT) * b_pad + num_steps * w_bytes

    out = pl.pallas_call(
        cnn1d_kernel,
        out_shape=jax.ShapeDtypeStruct((OUT, b_pad), jnp.float32),
        grid=(num_steps,),
        in_specs=[
            pl.BlockSpec((X_ROWS, tb), lambda i: (0, i)),       # x tile (batch on lanes)
            pl.BlockSpec((Y1_ROWS, X_ROWS), lambda i: (0, 0)),  # w1 (full, ~1.5 KiB)
            pl.BlockSpec((Y2_ROWS, Y1_ROWS), lambda i: (0, 0)),  # w2
            pl.BlockSpec((H_ROWS, Y2_ROWS), lambda i: (0, 0)),   # w3
            pl.BlockSpec((OUT, H_ROWS), lambda i: (0, 0)),       # w4
        ],
        out_specs=pl.BlockSpec((OUT, tb), lambda i: (0, i)),     # lane-dense output
        compiler_params=pltpu.CompilerParams(
            dimension_semantics=("parallel",),
            vmem_limit_bytes=32 * 1024 * 1024,
        ),
        cost_estimate=pl.CostEstimate(
            flops=flops, transcendentals=0, bytes_accessed=bytes_accessed),
    )(x_aug, w1, w2, w3, w4)

    return out[:, :B].T                                          # (B, 1)


def reference_forward(x_ncl, params):
    """Pure-JAX reference matching the PyTorch forward exactly (for verification)."""
    B = x_ncl.shape[0]
    x = x_ncl[:, 0, :]                                          # (B, 5)
    # conv1 -> (B, 16, 4)
    y1 = jnp.stack(
        [x[:, t:t + 1] * params["conv1_w"][None, :, 0, 0]
         + x[:, t + 1:t + 2] * params["conv1_w"][None, :, 0, 1]
         + params["conv1_b"][None, :]
         for t in range(L1)], axis=-1)
    y1 = jnp.maximum(y1, 0.0)
    # conv2 -> (B, 32, 3)
    y2 = jnp.stack(
        [jnp.einsum("bc,oc->bo", y1[:, :, t], params["conv2_w"][:, :, 0])
         + jnp.einsum("bc,oc->bo", y1[:, :, t + 1], params["conv2_w"][:, :, 1])
         + params["conv2_b"][None, :]
         for t in range(L2)], axis=-1)
    y2 = jnp.maximum(y2, 0.0)
    flat = y2.reshape(B, FLAT)                                  # channel-major, like x.view(B,-1)
    h = jnp.maximum(flat @ params["fc1_w"].T + params["fc1_b"][None, :], 0.0)
    return h @ params["fc2_w"].T + params["fc2_b"][None, :]


if __name__ == "__main__":
    key = jax.random.PRNGKey(0)
    k_param, k_x = jax.random.split(key)
    params = init_params(k_param)

    B = 8
    x = jax.random.normal(k_x, (B, 1, SEQ_LEN), dtype=jnp.float32)  # NCL, like PyTorch

    out = cnn1d_forward(x, params)
    out = jax.block_until_ready(out)

    ref = reference_forward(x, params)
    assert out.shape == (B, OUT), out.shape
    assert jnp.allclose(out, ref, atol=1e-4, rtol=1e-4), (out, ref)

    print("KERNEL_OK")
</pallas_src>

<mosaic_0001>
module attributes {stable_mosaic.version = 11 : i64} {
  func.func @cnn1d_kernel(%arg0: i32, %arg1: memref<6x128xf32, #tpu.memory_space<vmem>>, %arg2: memref<65x6xf32, #tpu.memory_space<vmem>>, %arg3: memref<97x65xf32, #tpu.memory_space<vmem>>, %arg4: memref<51x97xf32, #tpu.memory_space<vmem>>, %arg5: memref<1x51xf32, #tpu.memory_space<vmem>>, %arg6: memref<1x128xf32, #tpu.memory_space<vmem>>) attributes {dimension_semantics = [#tpu.dimension_semantics<parallel>], iteration_bounds = array<i64: 1>, scalar_prefetch = 0 : i64, scratch_operands = 0 : i64, tpu.core_type = #tpu.core_type<tc>, window_params = [{transform_indices = @transform_0, window_bounds = array<i64: 6, 128>}, {pipeline_mode = #tpu.pipeline_mode<synchronous>, transform_indices = @transform_1, window_bounds = array<i64: 65, 6>}, {pipeline_mode = #tpu.pipeline_mode<synchronous>, transform_indices = @transform_2, window_bounds = array<i64: 97, 65>}, {pipeline_mode = #tpu.pipeline_mode<synchronous>, transform_indices = @transform_3, window_bounds = array<i64: 51, 97>}, {pipeline_mode = #tpu.pipeline_mode<synchronous>, transform_indices = @transform_4, window_bounds = array<i64: 1, 51>}, {transform_indices = @transform_5, window_bounds = array<i64: 1, 128>}]} {
    %c0 = arith.constant 0 : index
    %c0_0 = arith.constant 0 : index
    %0 = vector.load %arg1[%c0, %c0_0] : memref<6x128xf32, #tpu.memory_space<vmem>>, vector<6x128xf32>
    %c0_1 = arith.constant 0 : index
    %c0_2 = arith.constant 0 : index
    %1 = vector.load %arg2[%c0_1, %c0_2] : memref<65x6xf32, #tpu.memory_space<vmem>>, vector<65x6xf32>
    %cst = arith.constant dense<0.000000e+00> : vector<65x128xf32>
    %2 = tpu.matmul %1, %0, %cst {dimension_numbers = #tpu.dot_dimension_numbers<[1], [0], [0], [1], [0, 0, 1, 1], [], []>} : vector<65x6xf32>, vector<6x128xf32>, vector<65x128xf32> -> vector<65x128xf32>
    %cst_3 = arith.constant 0.000000e+00 : f32
    %3 = vector.broadcast %cst_3 : f32 to vector<65x128xf32>
    %4 = arith.maximumf %2, %3 : vector<65x128xf32>
    %c0_4 = arith.constant 0 : index
    %c0_5 = arith.constant 0 : index
    %5 = vector.load %arg3[%c0_4, %c0_5] : memref<97x65xf32, #tpu.memory_space<vmem>>, vector<97x65xf32>
    %cst_6 = arith.constant dense<0.000000e+00> : vector<97x128xf32>
    %6 = tpu.matmul %5, %4, %cst_6 {dimension_numbers = #tpu.dot_dimension_numbers<[1], [0], [0], [1], [0, 0, 1, 1], [], []>} : vector<97x65xf32>, vector<65x128xf32>, vector<97x128xf32> -> vector<97x128xf32>
    %cst_7 = arith.constant 0.000000e+00 : f32
    %7 = vector.broadcast %cst_7 : f32 to vector<97x128xf32>
    %8 = arith.maximumf %6, %7 : vector<97x128xf32>
    %c0_8 = arith.constant 0 : index
    %c0_9 = arith.constant 0 : index
    %9 = vector.load %arg4[%c0_8, %c0_9] : memref<51x97xf32, #tpu.memory_space<vmem>>, vector<51x97xf32>
    %cst_10 = arith.constant dense<0.000000e+00> : vector<51x128xf32>
    %10 = tpu.matmul %9, %8, %cst_10 {dimension_numbers = #tpu.dot_dimension_numbers<[1], [0], [0], [1], [0, 0, 1, 1], [], []>} : vector<51x97xf32>, vector<97x128xf32>, vector<51x128xf32> -> vector<51x128xf32>
    %cst_11 = arith.constant 0.000000e+00 : f32
    %11 = vector.broadcast %cst_11 : f32 to vector<51x128xf32>
    %12 = arith.maximumf %10, %11 : vector<51x128xf32>
    %c0_12 = arith.constant 0 : index
    %c0_13 = arith.constant 0 : index
    %13 = vector.load %arg5[%c0_12, %c0_13] : memref<1x51xf32, #tpu.memory_space<vmem>>, vector<1x51xf32>
    %cst_14 = arith.constant dense<0.000000e+00> : vector<1x128xf32>
    %14 = tpu.matmul %13, %12, %cst_14 {dimension_numbers = #tpu.dot_dimension_numbers<[1], [0], [0], [1], [0, 0, 1, 1], [], []>} : vector<1x51xf32>, vector<51x128xf32>, vector<1x128xf32> -> vector<1x128xf32>
    %c0_15 = arith.constant 0 : index
    %c0_16 = arith.constant 0 : index
    %15 = vector.load %arg6[%c0_15, %c0_16] : memref<1x128xf32, #tpu.memory_space<vmem>>, vector<1x128xf32>
    tpu.vector_store %arg6[%c0_15, %c0_16], %14 {strides = array<i32>} : memref<1x128xf32, #tpu.memory_space<vmem>>, vector<1x128xf32>,
    return
  }
  func.func @transform_0(%arg0: i32) -> (i32, i32) {
    %c0_i32 = arith.constant 0 : i32
    %c0_i32_0 = arith.constant 0 : i32
    return %c0_i32, %arg0 : i32, i32
  }
  func.func @transform_1(%arg0: i32) -> (i32, i32) {
    %c0_i32 = arith.constant 0 : i32
    %c0_i32_0 = arith.constant 0 : i32
    %c0_i32_1 = arith.constant 0 : i32
    return %c0_i32, %c0_i32_0 : i32, i32
  }
  func.func @transform_2(%arg0: i32) -> (i32, i32) {
    %c0_i32 = arith.constant 0 : i32
    %c0_i32_0 = arith.constant 0 : i32
    %c0_i32_1 = arith.constant 0 : i32
    return %c0_i32, %c0_i32_0 : i32, i32
  }
  func.func @transform_3(%arg0: i32) -> (i32, i32) {
    %c0_i32 = arith.constant 0 : i32
    %c0_i32_0 = arith.constant 0 : i32
    %c0_i32_1 = arith.constant 0 : i32
    return %c0_i32, %c0_i32_0 : i32, i32
  }
  func.func @transform_4(%arg0: i32) -> (i32, i32) {
    %c0_i32 = arith.constant 0 : i32
    %c0_i32_0 = arith.constant 0 : i32
    %c0_i32_1 = arith.constant 0 : i32
    return %c0_i32, %c0_i32_0 : i32, i32
  }
  func.func @transform_5(%arg0: i32) -> (i32, i32) {
    %c0_i32 = arith.constant 0 : i32
    %c0_i32_0 = arith.constant 0 : i32
    return %c0_i32, %arg0 : i32, i32
  }
}

</mosaic_0001>

<llo_original>
// kernel: cnn1d_forward.1
$region0: #{cnn1d_forward.1}
  #allocation0 [shape = 'u32[]', space=smem, size = 0x4, offset = 0x4, fixed_abs, tag = 'smem constant byte address 0x4 - core index']
  #allocation1 [shape = 'u32[72,128]{1,0:T(1,128)}', space=vmem, size = 0x9000, scoped, tag = 'internal scratch']
  %s0 = inlined_call_operand.vmem [shape: f32[6,128], index: 0, kind: input, shape index: {}]
  %s1 = inlined_call_operand.vmem [shape: f32[65,6], index: 1, kind: input, shape index: {}]
  %s2 = inlined_call_operand.vmem [shape: f32[97,65], index: 2, kind: input, shape index: {}]
  %s3 = inlined_call_operand.vmem [shape: f32[51,97], index: 3, kind: input, shape index: {}]
  %s4 = inlined_call_operand.vmem [shape: f32[1,51], index: 4, kind: input, shape index: {}]
  %s5 = inlined_call_operand.vmem [shape: f32[1,128], index: 5, kind: output, shape index: {}]
  %s6 = sld [smem:[#allocation0]]
  $region30: #{cnn1d_forward.1} parent=0
    _
  %s8 = ssub.s32 1, %s6
  %s9 = scalar_select 0, %s8, %s6
  // Predicated region
  $region2: #{cnn1d_forward.1} parent=0 // pred_check
    _
  $region3: #{cnn1d_forward.1} parent=0 // pred_check_branch
    %11 = sbr.rel (0) target = $region5
  $region4: #{cnn1d_forward.1} parent=0 // pred_region
    _
  $region5: #{cnn1d_forward.1} parent=0 // pred_fallthru
    _
  // Predicated region
  $region6: #{cnn1d_forward.1} parent=0 // pred_check
    _
  $region7: #{cnn1d_forward.1} parent=0 // pred_check_branch
    %13 = sbr.rel (0) target = $region9
  $region8: #{cnn1d_forward.1} parent=0 // pred_region
    _
  $region9: #{cnn1d_forward.1} parent=0 // pred_fallthru
    _
  // Predicated region
  $region10: #{cnn1d_forward.1} parent=0 // pred_check
    _
  $region11: #{cnn1d_forward.1} parent=0 // pred_check_branch
    %15 = sbr.rel (0) target = $region13
  $region12: #{cnn1d_forward.1} parent=0 // pred_region
    _
  $region13: #{cnn1d_forward.1} parent=0 // pred_fallthru
    _
  // Predicated region
  $region14: #{cnn1d_forward.1} parent=0 // pred_check
    _
  $region15: #{cnn1d_forward.1} parent=0 // pred_check_branch
    %17 = sbr.rel (0) target = $region17
  $region16: #{cnn1d_forward.1} parent=0 // pred_region
    _
  $region17: #{cnn1d_forward.1} parent=0 // pred_fallthru
    _
  // Predicated region
  $region18: #{cnn1d_forward.1} parent=0 // pred_check
    _
  $region19: #{cnn1d_forward.1} parent=0 // pred_check_branch
    %19 = sbr.rel (0) target = $region21
  $region20: #{cnn1d_forward.1} parent=0 // pred_region
    _
  $region21: #{cnn1d_forward.1} parent=0 // pred_fallthru
    _
  %v20 = vld [vmem:[%s0] sm:$0x3f]
  %v21 = vld [vmem:[%s1] sm:$0xff]
  %v22 = vld [vmem:[%s1 + $0x8] sm:$0xff]
  %v23 = vld [vmem:[%s1 + $0x10] sm:$0xff]
  %v24 = vld [vmem:[%s1 + $0x18] sm:$0xff]
  %v25 = vld [vmem:[%s1 + $0x20] sm:$0xff]
  %v26 = vld [vmem:[%s1 + $0x28] sm:$0xff]
  %v27 = vld [vmem:[%s1 + $0x30] sm:$0xff]
  %v28 = vld [vmem:[%s1 + $0x38] sm:$0xff]
  %v29 = vld [vmem:[%s1 + $0x40] sm:$0x1]
  %vm30 = vcmask 48128
  %v32 = vsel %vm30, %v21, 0
  %v35 = vsel %vm30, %v22, 0
  %v38 = vsel %vm30, %v23, 0
  %v41 = vsel %vm30, %v24, 0
  %v44 = vsel %vm30, %v25, 0
  %v47 = vsel %vm30, %v26, 0
  %v50 = vsel %vm30, %v27, 0
  %v53 = vsel %vm30, %v28, 0
  %v56 = vsel %vm30, %v29, 0
  %vm58 = vcmask 1045504
  %v60 = vsel %vm58, %v20, 0
  %62 = vmatpush.msra.mxu0 0.0
  %63 = vmatpush.msra.mxu0 0.0
  %64 = vmatpush.msra.mxu0 0.0
  %65 = vmatpush.msra.mxu0 0.0
  %66 = vmatpush.msra.mxu0 0.0
  %67 = vmatpush.msra.mxu0 0.0
  %68 = vmatpush.msra.mxu0 0.0
  %69 = vmatpush.msra.mxu0 0.0
  %70 = vmatpush.msra.mxu0 0.0
  %71 = vmatpush.msra.mxu0 0.0
  %72 = vmatpush.msra.mxu0 0.0
  %73 = vmatpush.msra.mxu0 0.0
  %74 = vmatpush.msra.mxu0 0.0
  %75 = vmatpush.msra.mxu0 0.0
  %76 = vmatpush.msra.mxu0 0.0
  %77 = vmatpush.msra.mxu0 %v60
  %78 = vmatmul.f32.gmra.mxu0 %v32
  %v79 = vpop.f32.mrf.mxu0
  %v80 = vadd.f32 0.0, %v79
  %81 = vmatmul.f32.gmra.mxu0 %v35
  %v82 = vpop.f32.mrf.mxu0
  %v83 = vadd.f32 0.0, %v82
  %84 = vmatmul.f32.gmra.mxu0 %v38
  %v85 = vpop.f32.mrf.mxu0
  %v86 = vadd.f32 0.0, %v85
  %87 = vmatmul.f32.gmra.mxu0 %v41
  %v88 = vpop.f32.mrf.mxu0
  %v89 = vadd.f32 0.0, %v88
  %90 = vmatmul.f32.gmra.mxu0 %v44
  %v91 = vpop.f32.mrf.mxu0
  %v92 = vadd.f32 0.0, %v91
  %93 = vmatmul.f32.gmra.mxu0 %v47
  %v94 = vpop.f32.mrf.mxu0
  %v95 = vadd.f32 0.0, %v94
  %96 = vmatmul.f32.gmra.mxu0 %v50
  %v97 = vpop.f32.mrf.mxu0
  %v98 = vadd.f32 0.0, %v97
  %99 = vmatmul.f32.gmra.mxu0 %v53
  %v100 = vpop.f32.mrf.mxu0
  %v101 = vadd.f32 0.0, %v100
  %102 = vmatmul.f32.gmra.mxu0 %v56
  %v103 = vpop.f32.mrf.mxu0
  %v104 = vadd.f32 0.0, %v103
  %105 = vdwg.mxu0
  %v106 = vmax.f32 %v80, 0.0
  %v107 = vmax.f32 %v83, 0.0
  %v108 = vmax.f32 %v86, 0.0
  %v109 = vmax.f32 %v89, 0.0
  %v110 = vmax.f32 %v92, 0.0
  %v111 = vmax.f32 %v95, 0.0
  %v112 = vmax.f32 %v98, 0.0
  %v113 = vmax.f32 %v101, 0.0
  %v114 = vmax.f32 %v104, 0.0
  %v115 = vld [vmem:[%s2] sm:$0xff]
  %v116 = vld [vmem:[%s2 + $0x8] sm:$0xff]
  %v117 = vld [vmem:[%s2 + $0x10] sm:$0xff]
  %v118 = vld [vmem:[%s2 + $0x18] sm:$0xff]
  %v119 = vld [vmem:[%s2 + $0x20] sm:$0xff]
  %v120 = vld [vmem:[%s2 + $0x28] sm:$0xff]
  %v121 = vld [vmem:[%s2 + $0x30] sm:$0xff]
  %v122 = vld [vmem:[%s2 + $0x38] sm:$0xff]
  %v123 = vld [vmem:[%s2 + $0x40] sm:$0xff]
  %v124 = vld [vmem:[%s2 + $0x48] sm:$0xff]
  %v125 = vld [vmem:[%s2 + $0x50] sm:$0xff]
  %v126 = vld [vmem:[%s2 + $0x58] sm:$0xff]
  %v127 = vld [vmem:[%s2 + $0x60] sm:$0x1]
  %vm128 = vcmask 531456
  %v130 = vsel %vm128, %v115, 0
  %v133 = vsel %vm128, %v116, 0
  %v136 = vsel %vm128, %v117, 0
  %v139 = vsel %vm128, %v118, 0
  %v142 = vsel %vm128, %v119, 0
  %v145 = vsel %vm128, %v120, 0
  %v148 = vsel %vm128, %v121, 0
  %v151 = vsel %vm128, %v122, 0
  %v154 = vsel %vm128, %v123, 0
  %v157 = vsel %vm128, %v124, 0
  %v160 = vsel %vm128, %v125, 0
  %v163 = vsel %vm128, %v126, 0
  %v166 = vsel %vm128, %v127, 0
  %vm168 = vcmask 1040384
  %v170 = vsel %vm168, %v114, 0
  %172 = vmatpush.msra.mxu0 0.0
  %173 = vmatpush.msra.mxu0 0.0
  %174 = vmatpush.msra.mxu0 0.0
  %175 = vmatpush.msra.mxu0 0.0
  %176 = vmatpush.msra.mxu0 0.0
  %177 = vmatpush.msra.mxu0 0.0
  %178 = vmatpush.msra.mxu0 0.0
  %179 = vmatpush.msra.mxu0 %v170
  %180 = vmatpush.msra.mxu0 %v113
  %181 = vmatpush.msra.mxu0 %v112
  %182 = vmatpush.msra.mxu0 %v111
  %183 = vmatpush.msra.mxu0 %v110
  %184 = vmatpush.msra.mxu0 %v109
  %185 = vmatpush.msra.mxu0 %v108
  %186 = vmatpush.msra.mxu0 %v107
  %187 = vmatpush.msra.mxu0 %v106
  %188 = vmatmul.f32.gmra.mxu0 %v130
  %v189 = vpop.f32.mrf.mxu0
  %v190 = vadd.f32 0.0, %v189
  %191 = vmatmul.f32.gmra.mxu0 %v133
  %v192 = vpop.f32.mrf.mxu0
  %v193 = vadd.f32 0.0, %v192
  %194 = vmatmul.f32.gmra.mxu0 %v136
  %v195 = vpop.f32.mrf.mxu0
  %v196 = vadd.f32 0.0, %v195
  %197 = vmatmul.f32.gmra.mxu0 %v139
  %v198 = vpop.f32.mrf.mxu0
  %v199 = vadd.f32 0.0, %v198
  %200 = vmatmul.f32.gmra.mxu0 %v142
  %v201 = vpop.f32.mrf.mxu0
  %v202 = vadd.f32 0.0, %v201
  %203 = vmatmul.f32.gmra.mxu0 %v145
  %v204 = vpop.f32.mrf.mxu0
  %v205 = vadd.f32 0.0, %v204
  %206 = vmatmul.f32.gmra.mxu0 %v148
  %v207 = vpop.f32.mrf.mxu0
  %v208 = vadd.f32 0.0, %v207
  %209 = vmatmul.f32.gmra.mxu0 %v151
  %v210 = vpop.f32.mrf.mxu0
  %v211 = vadd.f32 0.0, %v210
  %212 = vmatmul.f32.gmra.mxu0 %v154
  %v213 = vpop.f32.mrf.mxu0
  %v214 = vadd.f32 0.0, %v213
  %215 = vmatmul.f32.gmra.mxu0 %v157
  %v216 = vpop.f32.mrf.mxu0
  %v217 = vadd.f32 0.0, %v216
  %218 = vmatmul.f32.gmra.mxu0 %v160
  %v219 = vpop.f32.mrf.mxu0
  %v220 = vadd.f32 0.0, %v219
  %221 = vmatmul.f32.gmra.mxu0 %v163
  %v222 = vpop.f32.mrf.mxu0
  %v223 = vadd.f32 0.0, %v222
  %224 = vmatmul.f32.gmra.mxu0 %v166
  %v225 = vpop.f32.mrf.mxu0
  %v226 = vadd.f32 0.0, %v225
  %227 = vdwg.mxu0
  %v228 = vmax.f32 %v190, 0.0
  %v229 = vmax.f32 %v193, 0.0
  %v230 = vmax.f32 %v196, 0.0
  %v231 = vmax.f32 %v199, 0.0
  %v232 = vmax.f32 %v202, 0.0
  %v233 = vmax.f32 %v205, 0.0
  %v234 = vmax.f32 %v208, 0.0
  %v235 = vmax.f32 %v211, 0.0
  %v236 = vmax.f32 %v214, 0.0
  %v237 = vmax.f32 %v217, 0.0
  %v238 = vmax.f32 %v220, 0.0
  %v239 = vmax.f32 %v223, 0.0
  %v240 = vmax.f32 %v226, 0.0
  %v241 = vld [vmem:[%s3] sm:$0xff]
  %v242 = vld [vmem:[%s3 + $0x8] sm:$0xff]
  %v243 = vld [vmem:[%s3 + $0x10] sm:$0xff]
  %v244 = vld [vmem:[%s3 + $0x18] sm:$0xff]
  %v245 = vld [vmem:[%s3 + $0x20] sm:$0xff]
  %v246 = vld [vmem:[%s3 + $0x28] sm:$0xff]
  %v247 = vld [vmem:[%s3 + $0x30] sm:$0x7]
  %vm248 = vcmask 793600
  %v250 = vsel %vm248, %v241, 0
  %v253 = vsel %vm248, %v242, 0
  %v256 = vsel %vm248, %v243, 0
  %v259 = vsel %vm248, %v244, 0
  %v262 = vsel %vm248, %v245, 0
  %v265 = vsel %vm248, %v246, 0
  %v268 = vsel %vm248, %v247, 0
  %v271 = vsel %vm168, %v240, 0
  %273 = vmatpush.msra.mxu0 0.0
  %274 = vmatpush.msra.mxu0 0.0
  %275 = vmatpush.msra.mxu0 0.0
  %276 = vmatpush.msra.mxu0 %v271
  %277 = vmatpush.msra.mxu0 %v239
  %278 = vmatpush.msra.mxu0 %v238
  %279 = vmatpush.msra.mxu0 %v237
  %280 = vmatpush.msra.mxu0 %v236
  %281 = vmatpush.msra.mxu0 %v235
  %282 = vmatpush.msra.mxu0 %v234
  %283 = vmatpush.msra.mxu0 %v233
  %284 = vmatpush.msra.mxu0 %v232
  %285 = vmatpush.msra.mxu0 %v231
  %286 = vmatpush.msra.mxu0 %v230
  %287 = vmatpush.msra.mxu0 %v229
  %288 = vmatpush.msra.mxu0 %v228
  %289 = vmatmul.f32.gmra.mxu0 %v250
  %v290 = vpop.f32.mrf.mxu0
  %v291 = vadd.f32 0.0, %v290
  %292 = vmatmul.f32.gmra.mxu0 %v253
  %v293 = vpop.f32.mrf.mxu0
  %v294 = vadd.f32 0.0, %v293
  %295 = vmatmul.f32.gmra.mxu0 %v256
  %v296 = vpop.f32.mrf.mxu0
  %v297 = vadd.f32 0.0, %v296
  %298 = vmatmul.f32.gmra.mxu0 %v259
  %v299 = vpop.f32.mrf.mxu0
  %v300 = vadd.f32 0.0, %v299
  %301 = vmatmul.f32.gmra.mxu0 %v262
  %v302 = vpop.f32.mrf.mxu0
  %v303 = vadd.f32 0.0, %v302
  %304 = vmatmul.f32.gmra.mxu0 %v265
  %v305 = vpop.f32.mrf.mxu0
  %v306 = vadd.f32 0.0, %v305
  %307 = vmatmul.f32.gmra.mxu0 %v268
  %v308 = vpop.f32.mrf.mxu0
  %v309 = vadd.f32 0.0, %v308
  %310 = vdwg.mxu0
  %v311 = vmax.f32 %v291, 0.0
  %v312 = vmax.f32 %v294, 0.0
  %v313 = vmax.f32 %v297, 0.0
  %v314 = vmax.f32 %v300, 0.0
  %v315 = vmax.f32 %v303, 0.0
  %v316 = vmax.f32 %v306, 0.0
  %v317 = vmax.f32 %v309, 0.0
  %v318 = vld [vmem:[%s4] sm:$0x1]
  %vm319 = vcmask 416768
  %v321 = vsel %vm319, %v318, 0
  %vm323 = vcmask 1042432
  %v325 = vsel %vm323, %v317, 0
  %327 = vmatpush.msra.mxu0 0.0
  %328 = vmatpush.msra.mxu0 0.0
  %329 = vmatpush.msra.mxu0 0.0
  %330 = vmatpush.msra.mxu0 0.0
  %331 = vmatpush.msra.mxu0 0.0
  %332 = vmatpush.msra.mxu0 0.0
  %333 = vmatpush.msra.mxu0 0.0
  %334 = vmatpush.msra.mxu0 0.0
  %335 = vmatpush.msra.mxu0 0.0
  %336 = vmatpush.msra.mxu0 %v325
  %337 = vmatpush.msra.mxu0 %v316
  %338 = vmatpush.msra.mxu0 %v315
  %339 = vmatpush.msra.mxu0 %v314
  %340 = vmatpush.msra.mxu0 %v313
  %341 = vmatpush.msra.mxu0 %v312
  %342 = vmatpush.msra.mxu0 %v311
  %343 = vmatmul.f32.gmra.mxu0 %v321
  %v344 = vpop.f32.mrf.mxu0
  %v345 = vadd.f32 0.0, %v344
  %346 = vdwg.mxu0
  %347 = vst [vmem:[%s5] sm:$0x1] %v345
  // Predicated region
  $region22: #{cnn1d_forward.1} parent=0 // pred_check
    _
  $region23: #{cnn1d_forward.1} parent=0 // pred_check_branch
    %349 = sbr.rel (0) target = $region25
  $region24: #{cnn1d_forward.1} parent=0 // pred_region
    _
  $region25: #{cnn1d_forward.1} parent=0 // pred_fallthru
    _
  // Predicated region
  $region26: #{cnn1d_forward.1} parent=0 // pred_check
    _
  $region27: #{cnn1d_forward.1} parent=0 // pred_check_branch
    %351 = sbr.rel (0) target = $region29
  $region28: #{cnn1d_forward.1} parent=0 // pred_region
    _
  $region29: #{cnn1d_forward.1} parent=0 // pred_fallthru
    _

</llo_original>
